<compile_context>
chip_gen: v5e
topology: v5e:2x2
jax: 0.10.0
libtpu: 0.0.40
codegen_flags: <defaults>
</compile_context>

<pallas_src>
import jax
import jax.numpy as jnp
from jax.experimental import pallas as pl
from jax.experimental.pallas import tpu as pltpu


def _mlp_kernel(x_ref, w_ref, o_ref):
    # x_ref: (2, tile_b) VMEM tile, batch on the lane axis.
    # w_ref: (2, 2) in SMEM (scalar reads only).
    # o_ref: (2, tile_b) VMEM tile.
    x0 = x_ref[0:1, :]                                   # (1, tile_b)
    x1 = x_ref[1:2, :]                                   # (1, tile_b)
    # y[j, :] = W[j, 0] * x0 + W[j, 1] * x1   -- SMEM scalar * vreg, VPU only.
    o_ref[0:1, :] = (w_ref[0, 0] * x0 + w_ref[0, 1] * x1).astype(o_ref.dtype)
    o_ref[1:2, :] = (w_ref[1, 0] * x0 + w_ref[1, 1] * x1).astype(o_ref.dtype)


def mlp_forward(t, x, w, *, tile_b=65536, vmem_limit_bytes=32 * 1024 * 1024):
    """Pallas equivalent of MLP.forward(t, x) with weight w of shape (2, 2).

    `t` mirrors the PyTorch signature but the forward pass never reads it,
    so it is not handed to the kernel (no DMA, no VMEM for it).
    """
    del t
    B, in_features = x.shape
    out_features, in_features_w = w.shape
    assert in_features == in_features_w == 2 and out_features == 2

    # Feature-major, lane-dense layout: (in_features, B), batch on lanes.
    xt = x.T

    # Tile the batch (lane) axis; last block dim must be a multiple of 128.
    lane = 128
    min_pad = ((B + lane - 1) // lane) * lane
    tb = min(tile_b, min_pad)
    b_pad = ((B + tb - 1) // tb) * tb
    if b_pad != B:
        xt = jnp.pad(xt, ((0, 0), (0, b_pad - B)))

    grid = (b_pad // tb,)

    itemsize = jnp.dtype(x.dtype).itemsize
    cost = pl.CostEstimate(
        flops=2 * B * in_features * out_features,
        transcendentals=0,
        bytes_accessed=(B * in_features + B * out_features) * itemsize
        + w.size * jnp.dtype(w.dtype).itemsize,
    )

    out_t = pl.pallas_call(
        _mlp_kernel,
        out_shape=jax.ShapeDtypeStruct((out_features, b_pad), x.dtype),
        grid=grid,
        in_specs=[
            pl.BlockSpec((in_features, tb), lambda i: (0, i)),              # x tile (VMEM)
            pl.BlockSpec(memory_space=pltpu.MemorySpace.SMEM),              # w scalars
        ],
        out_specs=pl.BlockSpec((out_features, tb), lambda i: (0, i)),
        compiler_params=pltpu.CompilerParams(
            dimension_semantics=("parallel",),        # 2 TCs on v7x; no-op elsewhere
            vmem_limit_bytes=vmem_limit_bytes,
        ),
        cost_estimate=cost,
    )(xt, w)

    # Back to the nn.Linear layout (B, out_features), dropping lane padding.
    return out_t[:, :B].T


if __name__ == "__main__":
    key = jax.random.PRNGKey(0)
    k_w, k_x, k_t = jax.random.split(key, 3)

    # Deterministic "parameter init" matching nn.Linear(2, 2, bias=False):
    # weight shape (out_features=2, in_features=2).
    bound = 1.0 / (2.0 ** 0.5)
    w = jax.random.uniform(k_w, (2, 2), dtype=jnp.float32,
                           minval=-bound, maxval=bound)

    # Small example inputs consistent with forward(t, x): batch=8, features=2.
    x = jax.random.normal(k_x, (8, 2), dtype=jnp.float32)
    t = jax.random.normal(k_t, (8, 1), dtype=jnp.float32)  # unused, as in torch

    out = mlp_forward(t, x, w)
    jax.block_until_ready(out)

    # Reference check against plain JAX (y = x @ W.T).
    ref = x @ w.T
    assert out.shape == (8, 2)
    assert jnp.allclose(out, ref, atol=1e-5, rtol=1e-5)

    print("KERNEL_OK")
</pallas_src>

<mosaic_0001>
module attributes {stable_mosaic.version = 11 : i64} {
  func.func @_mlp_kernel(%arg0: i32, %arg1: memref<2x128xf32, #tpu.memory_space<vmem>>, %arg2: memref<2x2xf32, #tpu.memory_space<smem>>, %arg3: memref<2x128xf32, #tpu.memory_space<vmem>>) attributes {dimension_semantics = [#tpu.dimension_semantics<parallel>], iteration_bounds = array<i64: 1>, scalar_prefetch = 0 : i64, scratch_operands = 0 : i64, tpu.core_type = #tpu.core_type<tc>, window_params = [{transform_indices = @transform_0, window_bounds = array<i64: 2, 128>}, {transform_indices = @transform_1, window_bounds = array<i64: 2, 2>}, {transform_indices = @transform_2, window_bounds = array<i64: 2, 128>}]} {
    %c0 = arith.constant 0 : index
    %c0_0 = arith.constant 0 : index
    %0 = vector.load %arg1[%c0, %c0_0] : memref<2x128xf32, #tpu.memory_space<vmem>>, vector<1x128xf32>
    %c1 = arith.constant 1 : index
    %c0_1 = arith.constant 0 : index
    %1 = vector.load %arg1[%c1, %c0_1] : memref<2x128xf32, #tpu.memory_space<vmem>>, vector<1x128xf32>
    %c0_2 = arith.constant 0 : index
    %c0_3 = arith.constant 0 : index
    %2 = memref.load %arg2[%c0_2, %c0_3] : memref<2x2xf32, #tpu.memory_space<smem>>
    %3 = vector.broadcast %2 : f32 to vector<1x128xf32>
    %4 = arith.mulf %3, %0 : vector<1x128xf32>
    %c0_4 = arith.constant 0 : index
    %c1_5 = arith.constant 1 : index
    %5 = memref.load %arg2[%c0_4, %c1_5] : memref<2x2xf32, #tpu.memory_space<smem>>
    %6 = vector.broadcast %5 : f32 to vector<1x128xf32>
    %7 = arith.mulf %6, %1 : vector<1x128xf32>
    %8 = arith.addf %4, %7 : vector<1x128xf32>
    %c0_6 = arith.constant 0 : index
    %c0_7 = arith.constant 0 : index
    %9 = vector.load %arg3[%c0_6, %c0_7] : memref<2x128xf32, #tpu.memory_space<vmem>>, vector<1x128xf32>
    tpu.vector_store %arg3[%c0_6, %c0_7], %8 {strides = array<i32>} : memref<2x128xf32, #tpu.memory_space<vmem>>, vector<1x128xf32>,
    %c1_8 = arith.constant 1 : index
    %c0_9 = arith.constant 0 : index
    %10 = memref.load %arg2[%c1_8, %c0_9] : memref<2x2xf32, #tpu.memory_space<smem>>
    %11 = vector.broadcast %10 : f32 to vector<1x128xf32>
    %12 = arith.mulf %11, %0 : vector<1x128xf32>
    %c1_10 = arith.constant 1 : index
    %c1_11 = arith.constant 1 : index
    %13 = memref.load %arg2[%c1_10, %c1_11] : memref<2x2xf32, #tpu.memory_space<smem>>
    %14 = vector.broadcast %13 : f32 to vector<1x128xf32>
    %15 = arith.mulf %14, %1 : vector<1x128xf32>
    %16 = arith.addf %12, %15 : vector<1x128xf32>
    %c1_12 = arith.constant 1 : index
    %c0_13 = arith.constant 0 : index
    %17 = vector.load %arg3[%c1_12, %c0_13] : memref<2x128xf32, #tpu.memory_space<vmem>>, vector<1x128xf32>
    tpu.vector_store %arg3[%c1_12, %c0_13], %16 {strides = array<i32>} : memref<2x128xf32, #tpu.memory_space<vmem>>, vector<1x128xf32>,
    return
  }
  func.func @transform_0(%arg0: i32) -> (i32, i32) {
    %c0_i32 = arith.constant 0 : i32
    %c0_i32_0 = arith.constant 0 : i32
    return %c0_i32, %arg0 : i32, i32
  }
  func.func @transform_1(%arg0: i32) -> (i32, i32) {
    %c0_i32 = arith.constant 0 : i32
    %c0_i32_0 = arith.constant 0 : i32
    %c0_i32_1 = arith.constant 0 : i32
    return %c0_i32, %c0_i32_0 : i32, i32
  }
  func.func @transform_2(%arg0: i32) -> (i32, i32) {
    %c0_i32 = arith.constant 0 : i32
    %c0_i32_0 = arith.constant 0 : i32
    return %c0_i32, %arg0 : i32, i32
  }
}

</mosaic_0001>

<llo_original>
// kernel: tpu_custom_call.1
$region0: #{tpu_custom_call.1}
  #allocation0 [shape = 'u32[]', space=smem, size = 0x4, offset = 0x4, fixed_abs, tag = 'smem constant byte address 0x4 - core index']
  #allocation1 [shape = 'u32[72,128]{1,0:T(1,128)}', space=vmem, size = 0x9000, scoped, tag = 'internal scratch']
  %s0 = inlined_call_operand.hbm [shape: f32[2,128], index: 0, kind: input, shape index: {}]
  %s1 = inlined_call_operand.hbm [shape: f32[2,2], index: 1, kind: input, shape index: {}]
  %s2 = inlined_call_operand.hbm [shape: f32[2,128], index: 2, kind: output, shape index: {}]
  %s3 = sld [smem:[#allocation0]]
  $region26: #{tpu_custom_call.1} parent=0
    _
  %s5 = ssub.s32 1, %s3
  %s6 = scalar_select 0, %s5, %s3
  $region1: #{tpu_custom_call.1} parent=0
    #allocation2 [shape = 'u8[1024]{0}', space=vmem, size = 0x400, scoped, tag = 'input window, operand 0, single buffered']
    #allocation3 [shape = 's32[1]{0}', space=sflag, size = 0x4, scoped, tag = 'scoped memory for tpu_custom_call.1']
    #allocation4 [shape = 's32[1]{0}', space=sflag, size = 0x4, scoped, tag = 'scoped memory for tpu_custom_call.1']
    #allocation5 [shape = 's32[1]{0}', space=sflag, size = 0x4, scoped, tag = 'scoped memory for tpu_custom_call.1']
    #allocation6 [shape = 'u8[1024]{0}', space=smem, size = 0x400, scoped, tag = 'input window, operand 1, single buffered']
    #allocation7 [shape = 'u8[1024]{0}', space=vmem, size = 0x400, scoped, tag = 'output window, operand 0, single buffered']
    %7 = vsyncpa [#allocation3], 0
    %8 = vsyncpa [#allocation5], 0
    %9 = vsyncpa [#allocation4], 0
    // Predicated region
    $region2: #{tpu_custom_call.1} parent=1 // pred_check
      _
    $region3: #{tpu_custom_call.1} parent=1 // pred_check_branch
      %11 = sbr.rel (0) target = $region5
    $region4: #{tpu_custom_call.1} parent=1 // pred_region
      %13 = vsyncadd [#allocation3], 0
      %s15 = sshll.u32 %s0, 4
      %s16 = int_to_ptr.hbm [resolvable:$true] %s15
      %s17 = sshll.u32 [#allocation2], 4
      %s18 = int_to_ptr.vmem [resolvable:$true] %s17
      %20 = dma.hbm_to_vmem [thread:$0]  %s16, 32, %s18, [#allocation3]
    $region5: #{tpu_custom_call.1} parent=1 // pred_fallthru
      _
    // Predicated region
    $region6: #{tpu_custom_call.1} parent=1 // pred_check
      _
    $region7: #{tpu_custom_call.1} parent=1 // pred_check_branch
      %22 = sbr.rel (0) target = $region9
    $region8: #{tpu_custom_call.1} parent=1 // pred_region
      %24 = vsyncadd [#allocation5], 0
      %s26 = sshll.u32 %s1, 4
      %s27 = int_to_ptr.hbm [resolvable:$true] %s26
      %29 = dma.hbm_to_smem %s27, 32, [#allocation6], [#allocation5]
    $region9: #{tpu_custom_call.1} parent=1 // pred_fallthru
      _
    // Predicated region
    $region10: #{tpu_custom_call.1} parent=1 // pred_check
      _
    $region11: #{tpu_custom_call.1} parent=1 // pred_check_branch
      %31 = sbr.rel (0) target = $region13
    $region12: #{tpu_custom_call.1} parent=1 // pred_region
      %33 = dma.done [#allocation3], 32
    $region13: #{tpu_custom_call.1} parent=1 // pred_fallthru
      _
    // Predicated region
    $region14: #{tpu_custom_call.1} parent=1 // pred_check
      _
    $region15: #{tpu_custom_call.1} parent=1 // pred_check_branch
      %35 = sbr.rel (0) target = $region17
    $region16: #{tpu_custom_call.1} parent=1 // pred_region
      %37 = dma.done [#allocation5], 32
    $region17: #{tpu_custom_call.1} parent=1 // pred_fallthru
      _
    %38 = sfence
    %v39 = vld [vmem:[#allocation2] sm:$0x1]
    %v40 = vld [vmem:[#allocation2 + $0x1] sm:$0x1]
    %s41 = sld [smem:[#allocation6]]
    %v42 = vstv %s41
    %v43 = vmul.f32 %v42, %v39
    %s44 = sld [smem:[#allocation6 + $0x1]]
    %v45 = vstv %s44
    %v46 = vmul.f32 %v45, %v40
    %v47 = vadd.f32 %v43, %v46
    %48 = vst [vmem:[#allocation7] sm:$0x1] %v47
    %s49 = sld [smem:[#allocation6 + $0x80]]
    %v50 = vstv %s49
    %v51 = vmul.f32 %v50, %v39
    %s52 = sld [smem:[#allocation6 + $0x81]]
    %v53 = vstv %s52
    %v54 = vmul.f32 %v53, %v40
    %v55 = vadd.f32 %v51, %v54
    %56 = vst [vmem:[#allocation7 + $0x1] sm:$0x1] %v55
    // Predicated region
    $region18: #{tpu_custom_call.1} parent=1 // pred_check
      _
    $region19: #{tpu_custom_call.1} parent=1 // pred_check_branch
      %58 = sbr.rel (0) target = $region21
    $region20: #{tpu_custom_call.1} parent=1 // pred_region
      %60 = vsyncadd [#allocation4], 0
      %s62 = sshll.u32 [#allocation7], 4
      %s63 = int_to_ptr.vmem [resolvable:$true] %s62
      %s64 = sshll.u32 %s2, 4
      %s65 = int_to_ptr.hbm [resolvable:$true] %s64
      %67 = dma.vmem_to_hbm [thread:$0]  %s63, 32, %s65, [#allocation4]
    $region21: #{tpu_custom_call.1} parent=1 // pred_fallthru
      _
    // Predicated region
    $region22: #{tpu_custom_call.1} parent=1 // pred_check
      _
    $region23: #{tpu_custom_call.1} parent=1 // pred_check_branch
      %69 = sbr.rel (0) target = $region25
    $region24: #{tpu_custom_call.1} parent=1 // pred_region
      %71 = dma.done [#allocation4], 32
    $region25: #{tpu_custom_call.1} parent=1 // pred_fallthru
      _
    %72 = vsyncpa [#allocation3], 1
    %73 = vsyncpa [#allocation4], 1
    %74 = vsyncpa [#allocation5], 1

</llo_original>
